<compile_context>
chip_gen: v5e
topology: v5e:2x2
jax: 0.10.0
libtpu: 0.0.40
codegen_flags: <defaults>
</compile_context>

<pallas_src>
import functools
import math

import jax
import jax.numpy as jnp
from jax import lax
from jax.experimental import pallas as pl
from jax.experimental.pallas import tpu as pltpu

_SUB = 16      # sublane granularity (multiple of 16 so bf16 blocks are legal)
_LANE = 128    # lane granularity
_NEG = -1e30   # additive bias for non-edges
_VMEM_LIMIT = 32 * 1024 * 1024


def _round_up(x, m):
    return (x + m - 1) // m * m


def _m_tile(M):
    return min(512, _round_up(M, _SUB))


def _k_tile(K):
    return min(1024, _round_up(K, _LANE))


def _n_tile(N):
    return min(512, _round_up(N, _LANE))


def _attn_tiles(Nd, Ns):
    tq = min(128, _round_up(Nd, _SUB))     # <=128 so Nd>=256 yields >1 parallel tiles
    tk = min(512, _round_up(Ns, _LANE))
    return tq, tk


# ----------------------------------------------------------------------------
# Tiled linear: y = relu?(x @ w + b).  bf16 operands, f32 accumulation,
# configurable output dtype (bf16 when the only consumer is a bf16 matmul).
# Weights/bias are pre-padded ONCE in prepare_params; only x is padded here.
# ----------------------------------------------------------------------------
def _linear_kernel(x_ref, w_ref, b_ref, o_ref, acc_ref, *, relu):
    @pl.when(pl.program_id(2) == 0)
    def _():
        acc_ref[...] = jnp.zeros_like(acc_ref)

    acc_ref[...] += jnp.dot(x_ref[...], w_ref[...],
                            preferred_element_type=jnp.float32)

    @pl.when(pl.program_id(2) == pl.num_programs(2) - 1)
    def _():
        y = acc_ref[...] + b_ref[...]
        if relu:
            y = jnp.maximum(y, 0.0)
        o_ref[...] = y.astype(o_ref.dtype)


def pad_linear_params(w, b):
    """One-time weight/bias padding to tile multiples (bf16 weights, f32 bias)."""
    K, N = w.shape
    tk, tn = _k_tile(K), _n_tile(N)
    Kp, Np = _round_up(K, tk), _round_up(N, tn)
    wp = jnp.zeros((Kp, Np), jnp.bfloat16).at[:K, :N].set(w.astype(jnp.bfloat16))
    bp = jnp.zeros((1, Np), jnp.float32).at[0, :N].set(b.astype(jnp.float32))
    return {"w": wp, "b": bp, "N": N, "tk": tk, "tn": tn}


def pallas_linear(x, lin, relu=False, out_dtype=jnp.float32):
    M, K = x.shape
    wp, bp = lin["w"], lin["b"]
    Kp, Np = wp.shape
    N, tk, tn = lin["N"], lin["tk"], lin["tn"]
    tm = _m_tile(M)
    Mp = _round_up(M, tm)
    xp = jnp.zeros((Mp, Kp), jnp.bfloat16).at[:M, :K].set(x.astype(jnp.bfloat16))
    out = pl.pallas_call(
        functools.partial(_linear_kernel, relu=relu),
        out_shape=jax.ShapeDtypeStruct((Mp, Np), out_dtype),
        grid=(Mp // tm, Np // tn, Kp // tk),
        in_specs=[
            pl.BlockSpec((tm, tk), lambda i, j, k: (i, k)),
            pl.BlockSpec((tk, tn), lambda i, j, k: (k, j)),
            pl.BlockSpec((1, tn), lambda i, j, k: (0, j)),
        ],
        out_specs=pl.BlockSpec((tm, tn), lambda i, j, k: (i, j)),
        scratch_shapes=[pltpu.VMEM((tm, tn), jnp.float32)],
        compiler_params=pltpu.CompilerParams(
            dimension_semantics=("parallel", "parallel", "arbitrary"),
            vmem_limit_bytes=_VMEM_LIMIT),
    )(xp, wp, bp)
    return out[:M, :N]


# ----------------------------------------------------------------------------
# erf-gelu (A&S rational erf approximation, |err| < 1.5e-7; lax.erf may not
# lower in Mosaic).  Applied once, in the attention finalize.
# ----------------------------------------------------------------------------
def _erf_approx(x):
    a1, a2, a3, a4, a5 = (0.254829592, -0.284496736, 1.421413741,
                          -1.453152027, 1.061405429)
    pc = 0.3275911
    sgn = jnp.where(x >= 0.0, 1.0, -1.0)
    ax = jnp.abs(x)
    t = 1.0 / (1.0 + pc * ax)
    poly = ((((a5 * t + a4) * t + a3) * t + a2) * t + a1) * t
    return sgn * (1.0 - poly * jnp.exp(-ax * ax))


def _gelu_erf(x):
    return 0.5 * x * (1.0 + _erf_approx(x * 0.7071067811865476))


# ----------------------------------------------------------------------------
# Fused output epilogue: out = gate * (a @ w + b) + (1 - gate) * residual
# ('a' is the already-gelu'd bf16 attention output.)
# ----------------------------------------------------------------------------
def _out_skip_kernel(a_ref, w_ref, b_ref, res_ref, gate_ref, o_ref, acc_ref):
    @pl.when(pl.program_id(2) == 0)
    def _():
        acc_ref[...] = jnp.zeros_like(acc_ref)

    acc_ref[...] += jnp.dot(a_ref[...], w_ref[...],
                            preferred_element_type=jnp.float32)

    @pl.when(pl.program_id(2) == pl.num_programs(2) - 1)
    def _():
        gate = gate_ref[0, 0]
        y = acc_ref[...] + b_ref[...]
        o_ref[...] = gate * y + (1.0 - gate) * res_ref[...]


def pallas_out_skip(a, lin, residual, gate):
    M, K = a.shape
    wp, bp = lin["w"], lin["b"]
    Kp, Np = wp.shape
    N, tk, tn = lin["N"], lin["tk"], lin["tn"]
    tm = _m_tile(M)
    Mp = _round_up(M, tm)
    ap = jnp.zeros((Mp, Kp), jnp.bfloat16).at[:M, :K].set(a.astype(jnp.bfloat16))
    rp = jnp.zeros((Mp, Np), jnp.float32).at[:M, :N].set(residual.astype(jnp.float32))
    out = pl.pallas_call(
        _out_skip_kernel,
        out_shape=jax.ShapeDtypeStruct((Mp, Np), jnp.float32),
        grid=(Mp // tm, Np // tn, Kp // tk),
        in_specs=[
            pl.BlockSpec((tm, tk), lambda i, j, k: (i, k)),
            pl.BlockSpec((tk, tn), lambda i, j, k: (k, j)),
            pl.BlockSpec((1, tn), lambda i, j, k: (0, j)),
            pl.BlockSpec((tm, tn), lambda i, j, k: (i, j)),
            pl.BlockSpec(memory_space=pltpu.MemorySpace.SMEM),
        ],
        out_specs=pl.BlockSpec((tm, tn), lambda i, j, k: (i, j)),
        scratch_shapes=[pltpu.VMEM((tm, tn), jnp.float32)],
        compiler_params=pltpu.CompilerParams(
            dimension_semantics=("parallel", "parallel", "arbitrary"),
            vmem_limit_bytes=_VMEM_LIMIT),
    )(ap, wp, bp, rp, gate)
    return out[:M, :N]


# ----------------------------------------------------------------------------
# Flash-style HGT attention over all incoming edge types of a dst type.
# q:[Nd,H*D] bf16 (1/sqrt(D) folded into W_q)   k,v:[Ns,H*D] bf16 (relation
# transforms + p_rel folded into the K/V projection weights)
# bias:[Nd_pad,Ns_pad] f32 additive mask (log(count) edges / -1e30 non-edges)
# flags:[n_i,n_j] int32 scalar-prefetched per-tile "has any edge" skip flags.
# Output: gelu(attention) as bf16 [Nd, H*D] (lane-dense, heads packed last).
# ----------------------------------------------------------------------------
def _flash_attn_kernel(flags_ref, q_ref, k_ref, v_ref, bias_ref, o_ref,
                       m_ref, l_ref, acc_ref, *, heads, head_dim):
    i = pl.program_id(0)
    j = pl.program_id(1)
    D = head_dim

    @pl.when(j == 0)
    def _():
        m_ref[...] = jnp.full(m_ref.shape, -jnp.inf, m_ref.dtype)
        l_ref[...] = jnp.zeros(l_ref.shape, l_ref.dtype)
        acc_ref[...] = jnp.zeros(acc_ref.shape, acc_ref.dtype)

    @pl.when(flags_ref[i, j] > 0)            # skip compute on edge-free tiles
    def _():
        bias = bias_ref[...]                  # (tq, tk) f32 additive mask
        # heads static -> unrolled; static lane slices keep everything lane-dense.
        # TODO(synk): for heads >= 4 switch to lax.fori_loop to bound live ranges.
        for h in range(heads):
            q = q_ref[:, h * D:(h + 1) * D]   # (tq, D) bf16
            k = k_ref[:, h * D:(h + 1) * D]   # (tk, D) bf16
            v = v_ref[:, h * D:(h + 1) * D]   # (tk, D) bf16
            s = lax.dot_general(q, k, (((1,), (1,)), ((), ())),
                                preferred_element_type=jnp.float32) + bias
            m_prev = m_ref[h]                 # (tq, 1) f32
            m_new = jnp.maximum(m_prev, jnp.max(s, axis=-1, keepdims=True))
            alpha = jnp.exp(m_prev - m_new)
            p = jnp.exp(s - m_new)            # exp(s - m) * count via log(count) bias
            l_ref[h] = alpha * l_ref[h] + jnp.sum(p, axis=-1, keepdims=True)
            acc_ref[:, h * D:(h + 1) * D] = (
                alpha * acc_ref[:, h * D:(h + 1) * D]
                + jnp.dot(p.astype(jnp.bfloat16), v,
                          preferred_element_type=jnp.float32))
            m_ref[h] = m_new

    @pl.when(j == pl.num_programs(1) - 1)
    def _():
        for h in range(heads):
            l = l_ref[h]
            m = m_ref[h]
            inv = pl.reciprocal(jnp.where(l > 0.0, l, 1.0), approx=True)
            # rows that never saw a real edge keep m <= -1e30 -> force 0 output
            valid = m > (-1e29)
            out_h = jnp.where(valid, acc_ref[:, h * D:(h + 1) * D] * inv, 0.0)
            o_ref[:, h * D:(h + 1) * D] = _gelu_erf(out_h).astype(o_ref.dtype)


def pallas_hgt_attention(q, k, v, info, heads, head_dim):
    H, D = heads, head_dim
    Nd, Ns = info["Nd"], info["Ns"]
    bias, flags = info["bias"], info["flags"]
    tq, tk = info["tq"], info["tk"]
    Nd_pad, Ns_pad = bias.shape
    qp = jnp.zeros((Nd_pad, H * D), jnp.bfloat16).at[:Nd, :].set(
        q.astype(jnp.bfloat16))
    kp = jnp.zeros((Ns_pad, H * D), jnp.bfloat16).at[:Ns, :].set(
        k.astype(jnp.bfloat16))
    vp = jnp.zeros((Ns_pad, H * D), jnp.bfloat16).at[:Ns, :].set(
        v.astype(jnp.bfloat16))
    out = pl.pallas_call(
        functools.partial(_flash_attn_kernel, heads=H, head_dim=D),
        out_shape=jax.ShapeDtypeStruct((Nd_pad, H * D), jnp.bfloat16),
        grid_spec=pltpu.PrefetchScalarGridSpec(
            num_scalar_prefetch=1,
            grid=(Nd_pad // tq, Ns_pad // tk),
            in_specs=[
                pl.BlockSpec((tq, H * D), lambda i, j, flags: (i, 0)),
                pl.BlockSpec((tk, H * D), lambda i, j, flags: (j, 0)),
                pl.BlockSpec((tk, H * D), lambda i, j, flags: (j, 0)),
                pl.BlockSpec((tq, tk), lambda i, j, flags: (i, j)),
            ],
            out_specs=pl.BlockSpec((tq, H * D), lambda i, j, flags: (i, 0)),
            scratch_shapes=[
                pltpu.VMEM((H, tq, 1), jnp.float32),   # m (running max)
                pltpu.VMEM((H, tq, 1), jnp.float32),   # l (running denom)
                pltpu.VMEM((tq, H * D), jnp.float32),  # acc (lane-dense)
            ]),
        compiler_params=pltpu.CompilerParams(
            dimension_semantics=("parallel", "arbitrary"),
            vmem_limit_bytes=_VMEM_LIMIT),
    )(flags, qp, kp, vp, bias)
    return out[:Nd, :]


# ----------------------------------------------------------------------------
# Parameter init (raw, PyTorch-like) + one-time prepare step (folding + padding)
# ----------------------------------------------------------------------------
def init_params(key, node_types, edge_types, hidden, heads, num_layers):
    D = hidden // heads
    keys = iter(jax.random.split(key, 256))

    def dense(k, fan_in, fan_out):
        return jax.random.normal(k, (fan_in, fan_out), jnp.float32) / jnp.sqrt(
            jnp.float32(fan_in))

    params = {"lin": {}, "convs": []}
    for t, (_, f) in node_types.items():
        params["lin"][t] = {"w": dense(next(keys), f, hidden),
                            "b": jnp.zeros((hidden,), jnp.float32)}
    for _ in range(num_layers):
        conv = {"kqv": {}, "out": {}, "skip": {}, "k_rel": {}, "v_rel": {}, "p_rel": {}}
        for t in node_types:
            conv["kqv"][t] = {"w": dense(next(keys), hidden, 3 * hidden),
                              "b": jnp.zeros((3 * hidden,), jnp.float32)}
            conv["out"][t] = {"w": dense(next(keys), hidden, hidden),
                              "b": jnp.zeros((hidden,), jnp.float32)}
            conv["skip"][t] = jnp.float32(1.0)       # PyG init: ones -> sigmoid gate
        for et in edge_types:
            conv["k_rel"][et] = jax.random.normal(next(keys), (heads, D, D),
                                                  jnp.float32) / jnp.sqrt(jnp.float32(D))
            conv["v_rel"][et] = jax.random.normal(next(keys), (heads, D, D),
                                                  jnp.float32) / jnp.sqrt(jnp.float32(D))
            conv["p_rel"][et] = jnp.ones((heads,), jnp.float32)   # PyG init: ones
        params["convs"].append(conv)
    return params


def _block_diag(mats):
    """[H, D, D] -> [H*D, H*D] block-diagonal matrix (one-time, in prepare)."""
    H, D, _ = mats.shape
    out = jnp.zeros((H * D, H * D), mats.dtype)
    for h in range(H):
        out = out.at[h * D:(h + 1) * D, h * D:(h + 1) * D].set(mats[h])
    return out


def prepare_params(params, hidden, heads):
    """One-time: fold relation transforms / p_rel / 1/sqrt(D) into projection
    weights, pre-pad all weights to tile multiples (bf16), precompute gates."""
    D = hidden // heads
    scale = 1.0 / math.sqrt(D)
    prep = {"lin": {t: pad_linear_params(p["w"], p["b"])
                    for t, p in params["lin"].items()},
            "convs": []}
    for conv in params["convs"]:
        c = {"q": {}, "out": {}, "gate": {}, "K": {}, "V": {}}
        for t, kqv in conv["kqv"].items():
            w, b = kqv["w"], kqv["b"]
            # kqv concatenation order is (k, q, v) along the output dim
            w_q, b_q = w[:, hidden:2 * hidden], b[hidden:2 * hidden]
            c["q"][t] = pad_linear_params(w_q * scale, b_q * scale)
            c["out"][t] = pad_linear_params(conv["out"][t]["w"], conv["out"][t]["b"])
            c["gate"][t] = jnp.reshape(jax.nn.sigmoid(conv["skip"][t]),
                                       (1, 1)).astype(jnp.float32)
        for et, k_rel in conv["k_rel"].items():
            src = et[0]
            w, b = conv["kqv"][src]["w"], conv["kqv"][src]["b"]
            w_k, b_k = w[:, :hidden], b[:hidden]
            w_v, b_v = w[:, 2 * hidden:], b[2 * hidden:]
            a_k = _block_diag(k_rel * conv["p_rel"][et][:, None, None])
            a_v = _block_diag(conv["v_rel"][et])
            c["K"][et] = pad_linear_params(w_k @ a_k, b_k @ a_k)
            c["V"][et] = pad_linear_params(w_v @ a_v, b_v @ a_v)
        prep["convs"].append(c)
    return prep


# ----------------------------------------------------------------------------
# Graph preprocessing: additive bias masks + per-tile skip flags (built ONCE;
# edge_index is layer-invariant).
# ----------------------------------------------------------------------------
def precompute_attention_masks(x_dict, edge_index_dict, edge_types):
    dst_types = sorted({et[2] for et in edge_types})
    masks = {}
    for t in dst_types:
        rels = [et for et in edge_types if et[2] == t]
        Nd = x_dict[t].shape[0]
        parts = []
        for et in rels:
            Ns_e = x_dict[et[0]].shape[0]
            ei = edge_index_dict[et]                      # [2, E] (src, dst)
            parts.append(jnp.zeros((Nd, Ns_e), jnp.float32)
                         .at[ei[1], ei[0]].add(1.0))
        count = jnp.concatenate(parts, axis=1)            # edge multiplicity
        Ns = count.shape[1]
        tq, tk = _attn_tiles(Nd, Ns)
        Nd_pad, Ns_pad = _round_up(Nd, tq), _round_up(Ns, tk)
        cp = jnp.zeros((Nd_pad, Ns_pad), jnp.float32).at[:Nd, :Ns].set(count)
        # additive bias: log(count) for edges, large negative for non-edges/padding
        bias = jnp.where(cp > 0.0, jnp.log(jnp.maximum(cp, 1.0)), _NEG)
        flags = (cp > 0.0).reshape(Nd_pad // tq, tq, Ns_pad // tk, tk) \
            .any(axis=(1, 3)).astype(jnp.int32)
        masks[t] = {"rels": rels, "bias": bias, "flags": flags,
                    "Nd": Nd, "Ns": Ns, "tq": tq, "tk": tk}
    return masks


# ----------------------------------------------------------------------------
# HGT conv layer + full forward
# ----------------------------------------------------------------------------
def hgt_conv_layer(prep_conv, x_dict, masks, hidden, heads):
    D = hidden // heads
    # TODO(synk): batch the per-node-type / per-edge-type projections across types
    # with scalar-prefetched row offsets (PrefetchScalarGridSpec) into a single
    # pallas_call per stage, and remap kv-tile indices to skip the DMA of empty tiles.
    q_dict = {t: pallas_linear(x_dict[t], prep_conv["q"][t], out_dtype=jnp.bfloat16)
              for t in masks}
    out_dict = {}
    for t, info in masks.items():
        K_parts, V_parts = [], []
        for et in info["rels"]:
            src = et[0]
            K_parts.append(pallas_linear(x_dict[src], prep_conv["K"][et],
                                         out_dtype=jnp.bfloat16))
            V_parts.append(pallas_linear(x_dict[src], prep_conv["V"][et],
                                         out_dtype=jnp.bfloat16))
        K = jnp.concatenate(K_parts, axis=0)              # [Ns, hidden] bf16
        V = jnp.concatenate(V_parts, axis=0)
        agg = pallas_hgt_attention(q_dict[t], K, V, info, heads, D)  # gelu'd bf16
        out_dict[t] = pallas_out_skip(agg, prep_conv["out"][t],
                                      x_dict[t], prep_conv["gate"][t])
    return out_dict


def hgt_forward(prep, x_dict, edge_index_dict, edge_types, hidden, heads):
    masks = precompute_attention_masks(x_dict, edge_index_dict, edge_types)
    out = {t: pallas_linear(x, prep["lin"][t], relu=True) for t, x in x_dict.items()}
    for conv in prep["convs"]:
        out = hgt_conv_layer(conv, out, masks, hidden, heads)
    return out


# ----------------------------------------------------------------------------
# Demo
# ----------------------------------------------------------------------------
if __name__ == "__main__":
    HIDDEN, HEADS, NUM_LAYERS = 32, 2, 2
    NODE_TYPES = {"region": (12, 8), "sensor": (16, 12)}   # name -> (num_nodes, feat_dim)
    EDGE_TYPES = [("region", "adj", "region"),
                  ("region", "near", "sensor"),
                  ("sensor", "obs", "region")]

    root = jax.random.PRNGKey(0)
    kx, ke, kp = jax.random.split(root, 3)

    # node features
    xkeys = jax.random.split(kx, len(NODE_TYPES))
    x_dict = {t: jax.random.normal(k, (n, f), jnp.float32)
              for (t, (n, f)), k in zip(NODE_TYPES.items(), xkeys)}

    # edge indices, PyG convention [2, E] (row0 = src node id, row1 = dst node id)
    edge_index_dict = {}
    ekeys = jax.random.split(ke, len(EDGE_TYPES))
    n_edges = {("region", "adj", "region"): 20,
               ("region", "near", "sensor"): 24,
               ("sensor", "obs", "region"): 24}
    for et, k in zip(EDGE_TYPES, ekeys):
        ks, kd = jax.random.split(k)
        n_src = NODE_TYPES[et[0]][0]
        n_dst = NODE_TYPES[et[2]][0]
        e = n_edges[et]
        src = jax.random.randint(ks, (e,), 0, n_src, dtype=jnp.int32)
        dst = jax.random.randint(kd, (e,), 0, n_dst, dtype=jnp.int32)
        edge_index_dict[et] = jnp.stack([src, dst], axis=0)

    params = init_params(kp, NODE_TYPES, EDGE_TYPES, HIDDEN, HEADS, NUM_LAYERS)
    prep = prepare_params(params, HIDDEN, HEADS)   # one-time folding + padding

    out = hgt_forward(prep, x_dict, edge_index_dict, EDGE_TYPES, HIDDEN, HEADS)

    ok = True
    for t, v in out.items():
        v = jax.block_until_ready(v)
        ok &= bool(jnp.all(jnp.isfinite(v)))
        ok &= (v.shape == (NODE_TYPES[t][0], HIDDEN))
    if ok:
        print("KERNEL_OK")
</pallas_src>

<mosaic_0001>
module attributes {stable_mosaic.version = 11 : i64} {
  func.func @_linear_kernel(%arg0: i32, %arg1: i32, %arg2: i32, %arg3: memref<16x128xbf16, #tpu.memory_space<vmem>>, %arg4: memref<128x128xbf16, #tpu.memory_space<vmem>>, %arg5: memref<1x128xf32, #tpu.memory_space<vmem>>, %arg6: memref<16x128xf32, #tpu.memory_space<vmem>>, %arg7: memref<16x128xf32, #tpu.memory_space<vmem>>) attributes {dimension_semantics = [#tpu.dimension_semantics<parallel>, #tpu.dimension_semantics<parallel>, #tpu.dimension_semantics<arbitrary>], iteration_bounds = array<i64: 1, 1, 1>, scalar_prefetch = 0 : i64, scratch_operands = 1 : i64, tpu.core_type = #tpu.core_type<tc>, window_params = [{transform_indices = @transform_0, window_bounds = array<i64: 16, 128>}, {transform_indices = @transform_1, window_bounds = array<i64: 128, 128>}, {transform_indices = @transform_2, window_bounds = array<i64: 1, 128>}, {transform_indices = @transform_3, window_bounds = array<i64: 16, 128>}]} {
    %c0_i32 = arith.constant 0 : i32
    %0 = arith.cmpi eq, %arg2, %c0_i32 : i32
    %1 = arith.extui %0 : i1 to i32
    %c0_i32_0 = arith.constant 0 : i32
    %2 = arith.cmpi ne, %1, %c0_i32_0 : i32
    scf.if %2 {
      %cst_10 = arith.constant 0.000000e+00 : f32
      %12 = vector.broadcast %cst_10 : f32 to vector<16x128xf32>
      %c0_11 = arith.constant 0 : index
      %c0_12 = arith.constant 0 : index
      %13 = vector.load %arg7[%c0_11, %c0_12] : memref<16x128xf32, #tpu.memory_space<vmem>>, vector<16x128xf32>
      tpu.vector_store %arg7[%c0_11, %c0_12], %12 {strides = array<i32>} : memref<16x128xf32, #tpu.memory_space<vmem>>, vector<16x128xf32>,
    } else {
    }
    %c0 = arith.constant 0 : index
    %c0_1 = arith.constant 0 : index
    %3 = vector.load %arg7[%c0, %c0_1] : memref<16x128xf32, #tpu.memory_space<vmem>>, vector<16x128xf32>
    %c0_2 = arith.constant 0 : index
    %c0_3 = arith.constant 0 : index
    %4 = vector.load %arg3[%c0_2, %c0_3] : memref<16x128xbf16, #tpu.memory_space<vmem>>, vector<16x128xbf16>
    %c0_4 = arith.constant 0 : index
    %c0_5 = arith.constant 0 : index
    %5 = vector.load %arg4[%c0_4, %c0_5] : memref<128x128xbf16, #tpu.memory_space<vmem>>, vector<128x128xbf16>
    %cst = arith.constant dense<0.000000e+00> : vector<16x128xf32>
    %6 = tpu.matmul %4, %5, %cst {dimension_numbers = #tpu.dot_dimension_numbers<[1], [0], [0], [1], [0, 0, 1, 1], [], []>} : vector<16x128xbf16>, vector<128x128xbf16>, vector<16x128xf32> -> vector<16x128xf32>
    %7 = arith.addf %3, %6 : vector<16x128xf32>
    %c0_6 = arith.constant 0 : index
    %c0_7 = arith.constant 0 : index
    %8 = vector.load %arg7[%c0_6, %c0_7] : memref<16x128xf32, #tpu.memory_space<vmem>>, vector<16x128xf32>
    tpu.vector_store %arg7[%c0_6, %c0_7], %7 {strides = array<i32>} : memref<16x128xf32, #tpu.memory_space<vmem>>, vector<16x128xf32>,
    %c0_i32_8 = arith.constant 0 : i32
    %9 = arith.cmpi eq, %arg2, %c0_i32_8 : i32
    %10 = arith.extui %9 : i1 to i32
    %c0_i32_9 = arith.constant 0 : i32
    %11 = arith.cmpi ne, %10, %c0_i32_9 : i32
    scf.if %11 {
      %c0_10 = arith.constant 0 : index
      %c0_11 = arith.constant 0 : index
      %12 = vector.load %arg7[%c0_10, %c0_11] : memref<16x128xf32, #tpu.memory_space<vmem>>, vector<16x128xf32>
      %c0_12 = arith.constant 0 : index
      %c0_13 = arith.constant 0 : index
      %13 = vector.load %arg5[%c0_12, %c0_13] : memref<1x128xf32, #tpu.memory_space<vmem>>, vector<1x128xf32>
      %14 = vector.broadcast %13 : vector<1x128xf32> to vector<16x128xf32>
      %15 = arith.addf %12, %14 : vector<16x128xf32>
      %cst_14 = arith.constant 0.000000e+00 : f32
      %16 = vector.broadcast %cst_14 : f32 to vector<16x128xf32>
      %17 = arith.maximumf %15, %16 : vector<16x128xf32>
      %c0_15 = arith.constant 0 : index
      %c0_16 = arith.constant 0 : index
      %18 = vector.load %arg6[%c0_15, %c0_16] : memref<16x128xf32, #tpu.memory_space<vmem>>, vector<16x128xf32>
      tpu.vector_store %arg6[%c0_15, %c0_16], %17 {strides = array<i32>} : memref<16x128xf32, #tpu.memory_space<vmem>>, vector<16x128xf32>,
    } else {
    }
    return
  }
  func.func @transform_0(%arg0: i32, %arg1: i32, %arg2: i32) -> (i32, i32) {
    %c0_i32 = arith.constant 0 : i32
    return %arg0, %arg2 : i32, i32
  }
  func.func @transform_1(%arg0: i32, %arg1: i32, %arg2: i32) -> (i32, i32) {
    %c0_i32 = arith.constant 0 : i32
    return %arg2, %arg1 : i32, i32
  }
  func.func @transform_2(%arg0: i32, %arg1: i32, %arg2: i32) -> (i32, i32) {
    %c0_i32 = arith.constant 0 : i32
    %c0_i32_0 = arith.constant 0 : i32
    return %c0_i32, %arg1 : i32, i32
  }
  func.func @transform_3(%arg0: i32, %arg1: i32, %arg2: i32) -> (i32, i32) {
    %c0_i32 = arith.constant 0 : i32
    return %arg0, %arg1 : i32, i32
  }
}

</mosaic_0001>

<llo_original>
// kernel: tpu_custom_call.1
$region0: #{tpu_custom_call.1}
  #allocation0 [shape = 'u32[]', space=smem, size = 0x4, offset = 0x4, fixed_abs, tag = 'smem constant byte address 0x4 - core index']
  #allocation1 [shape = 'u32[72,128]{1,0:T(1,128)}', space=vmem, size = 0x9000, scoped, tag = 'internal scratch']
  #allocation2 [shape = 'f32[16,128]{1,0:T(8,128)}', space=vmem, size = 0x2000, scoped, tag = 'scratch operand']
  %s0 = inlined_call_operand.hbm [shape: bf16[16,128], index: 0, kind: input, shape index: {}]
  %s1 = inlined_call_operand.hbm [shape: bf16[128,128], index: 1, kind: input, shape index: {}]
  %s2 = inlined_call_operand.vmem [shape: f32[1,128], index: 2, kind: input, shape index: {}]
  %s3 = inlined_call_operand.hbm [shape: f32[16,128], index: 3, kind: output, shape index: {}]
  %s4 = sld [smem:[#allocation0]]
  $region38: #{tpu_custom_call.1} parent=0
    _
  %s6 = ssub.s32 1, %s4
  %s7 = scalar_select 0, %s6, %s4
  $region1: #{tpu_custom_call.1} parent=0
    #allocation3 [shape = 'u8[4096]{0}', space=vmem, size = 0x1000, scoped, tag = 'input window, operand 0, single buffered']
    #allocation4 [shape = 's32[1]{0}', space=sflag, size = 0x4, scoped, tag = 'scoped memory for tpu_custom_call.1']
    #allocation5 [shape = 's32[1]{0}', space=sflag, size = 0x4, scoped, tag = 'scoped memory for tpu_custom_call.1']
    #allocation6 [shape = 'u8[32768]{0}', space=vmem, size = 0x8000, scoped, tag = 'input window, operand 1, single buffered']
    #allocation7 [shape = 's32[1]{0}', space=sflag, size = 0x4, scoped, tag = 'scoped memory for tpu_custom_call.1']
    #allocation8 [shape = 'u8[8192]{0}', space=vmem, size = 0x2000, scoped, tag = 'output window, operand 0, single buffered']
    %8 = vsyncpa [#allocation4], 0
    %9 = vsyncpa [#allocation7], 0
    %10 = vsyncpa [#allocation5], 0
    // Predicated region
    $region2: #{tpu_custom_call.1} parent=1 // pred_check
      _
    $region3: #{tpu_custom_call.1} parent=1 // pred_check_branch
      %12 = sbr.rel (0) target = $region5
    $region4: #{tpu_custom_call.1} parent=1 // pred_region
      %14 = vsyncadd [#allocation4], 0
      %s15 = sshll.u32 %s0, 4
      %s16 = int_to_ptr.hbm [resolvable:$true] %s15
      %s17 = sshll.u32 [#allocation3], 4
      %s18 = int_to_ptr.vmem [resolvable:$true] %s17
      %23 = dma.hbm_to_vmem [thread:$0]  %s16, 128, %s18, [#allocation4], 64, 64, 4
    $region5: #{tpu_custom_call.1} parent=1 // pred_fallthru
      _
    // Predicated region
    $region6: #{tpu_custom_call.1} parent=1 // pred_check
      _
    $region7: #{tpu_custom_call.1} parent=1 // pred_check_branch
      %25 = sbr.rel (0) target = $region9
    $region8: #{tpu_custom_call.1} parent=1 // pred_region
      %27 = vsyncadd [#allocation7], 0
      %s28 = sshll.u32 %s1, 4
      %s29 = int_to_ptr.hbm [resolvable:$true] %s28
      %s30 = sshll.u32 [#allocation6], 4
      %s31 = int_to_ptr.vmem [resolvable:$true] %s30
      %36 = dma.hbm_to_vmem [thread:$0]  %s29, 1024, %s31, [#allocation7], 64, 64, 4
    $region9: #{tpu_custom_call.1} parent=1 // pred_fallthru
      _
    // Predicated region
    $region10: #{tpu_custom_call.1} parent=1 // pred_check
      _
    $region11: #{tpu_custom_call.1} parent=1 // pred_check_branch
      %38 = sbr.rel (0) target = $region13
    $region12: #{tpu_custom_call.1} parent=1 // pred_region
      _
    $region13: #{tpu_custom_call.1} parent=1 // pred_fallthru
      _
    // Predicated region
    $region14: #{tpu_custom_call.1} parent=1 // pred_check
      _
    $region15: #{tpu_custom_call.1} parent=1 // pred_check_branch
      %40 = sbr.rel (0) target = $region17
    $region16: #{tpu_custom_call.1} parent=1 // pred_region
      %42 = dma.done [#allocation4], 128
    $region17: #{tpu_custom_call.1} parent=1 // pred_fallthru
      _
    // Predicated region
    $region18: #{tpu_custom_call.1} parent=1 // pred_check
      _
    $region19: #{tpu_custom_call.1} parent=1 // pred_check_branch
      %44 = sbr.rel (0) target = $region21
    $region20: #{tpu_custom_call.1} parent=1 // pred_region
      %46 = dma.done [#allocation7], 1024
    $region21: #{tpu_custom_call.1} parent=1 // pred_fallthru
      _
    %p47 = scmp.eq.s32.totalorder 0, 0
    // Predicated region
    $region22: #{tpu_custom_call.1} parent=1 // pred_check
      %p48 = pneg %p47
    $region23: #{tpu_custom_call.1} parent=1 // pred_check_branch
      %50 = sbr.rel (%p48) target = $region25
    $region24: #{tpu_custom_call.1} parent=1 // pred_region
      %51 = vst [vmem:[#allocation2] sm:$0xff] 0.0
      %52 = vst [vmem:[#allocation2 + $0x8] sm:$0xff] 0.0
    $region25: #{tpu_custom_call.1} parent=1 // pred_fallthru
      _
    %v53 = vld [vmem:[#allocation2] sm:$0xff]
    %v54 = vld [vmem:[#allocation2 + $0x8] sm:$0xff]
    %v55 = vld [vmem:[#allocation3] sm:$0xf]
    %v56 = vld [vmem:[#allocation3 + $0x4] sm:$0xf]
    %v57 = vld [vmem:[#allocation6] sm:$0xf]
    %v58 = vld [vmem:[#allocation6 + $0x4] sm:$0xf]
    %v59 = vld [vmem:[#allocation6 + $0x8] sm:$0xf]
    %v60 = vld [vmem:[#allocation6 + $0xc] sm:$0xf]
    %v61 = vld [vmem:[#allocation6 + $0x10] sm:$0xf]
    %v62 = vld [vmem:[#allocation6 + $0x14] sm:$0xf]
    %v63 = vld [vmem:[#allocation6 + $0x18] sm:$0xf]
    %v64 = vld [vmem:[#allocation6 + $0x1c] sm:$0xf]
    %v65 = vld [vmem:[#allocation6 + $0x20] sm:$0xf]
    %v66 = vld [vmem:[#allocation6 + $0x24] sm:$0xf]
    %v67 = vld [vmem:[#allocation6 + $0x28] sm:$0xf]
    %v68 = vld [vmem:[#allocation6 + $0x2c] sm:$0xf]
    %v69 = vld [vmem:[#allocation6 + $0x30] sm:$0xf]
    %v70 = vld [vmem:[#allocation6 + $0x34] sm:$0xf]
    %v71 = vld [vmem:[#allocation6 + $0x38] sm:$0xf]
    %v72 = vld [vmem:[#allocation6 + $0x3c] sm:$0xf]
    %v75 = vunpack.c.l.b16 %v55
    %v76 = vunpack.c.l.b16 %v56
    %v77 = vpack.c.b16 %v76, %v75
    %v95 = vunpack.c.l.b16 %v57
    %v96 = vunpack.c.l.b16 %v58
    %v97 = vunpack.c.l.b16 %v59
    %v98 = vunpack.c.l.b16 %v60
    %v99 = vunpack.c.l.b16 %v61
    %v100 = vunpack.c.l.b16 %v62
    %v101 = vunpack.c.l.b16 %v63
    %v102 = vunpack.c.l.b16 %v64
    %v103 = vunpack.c.l.b16 %v65
    %v104 = vunpack.c.l.b16 %v66
    %v105 = vunpack.c.l.b16 %v67
    %v106 = vunpack.c.l.b16 %v68
    %v107 = vunpack.c.l.b16 %v69
    %v108 = vunpack.c.l.b16 %v70
    %v109 = vunpack.c.l.b16 %v71
    %v110 = vunpack.c.l.b16 %v72
    %v111 = vpack.c.b16 %v96, %v95
    %v112 = vpack.c.b16 %v98, %v97
    %v113 = vpack.c.b16 %v100, %v99
    %v114 = vpack.c.b16 %v102, %v101
    %v115 = vpack.c.b16 %v104, %v103
    %v116 = vpack.c.b16 %v106, %v105
    %v117 = vpack.c.b16 %v108, %v107
    %v118 = vpack.c.b16 %v110, %v109
    %127 = vmatpush.bf16.msra.mxu0 %v118
    %128 = vmatpush.bf16.msra.mxu0 %v117
    %129 = vmatpush.bf16.msra.mxu0 %v116
    %130 = vmatpush.bf16.msra.mxu0 %v115
    %131 = vmatpush.bf16.msra.mxu0 %v114
    %132 = vmatpush.bf16.msra.mxu0 %v113
    %133 = vmatpush.bf16.msra.mxu0 %v112
    %134 = vmatpush.bf16.msra.mxu0 %v111
    %135 = vmatmul.bf16.gmra.mxu0 %v77
    %v136 = vpop.f32.mrf.mxu0
    %v137 = vadd.f32 0.0, %v136
    %v138 = vpop.f32.mrf.mxu0
    %v139 = vadd.f32 0.0, %v138
    %140 = vdwg.mxu0
    %v141 = vadd.f32 %v53, %v137
    %v142 = vadd.f32 %v54, %v139
    %143 = vst [vmem:[#allocation2] sm:$0xff] %v141
    %144 = vst [vmem:[#allocation2 + $0x8] sm:$0xff] %v142
    // Predicated region
    $region26: #{tpu_custom_call.1} parent=1 // pred_check
      %p145 = pneg %p47
    $region27: #{tpu_custom_call.1} parent=1 // pred_check_branch
      %147 = sbr.rel (%p145) target = $region29
    $region28: #{tpu_custom_call.1} parent=1 // pred_region
      %v148 = vld [vmem:[#allocation2] sm:$0xff]
      %v149 = vld [vmem:[#allocation2 + $0x8] sm:$0xff]
      %v150 = vld [vmem:[%s2] sm:$0x1]
      %v152 = vperm.slane %v150, 0
      %v154 = vadd.f32 %v148, %v152
      %v155 = vadd.f32 %v149, %v152
      %v156 = vmax.f32 %v154, 0.0
      %v157 = vmax.f32 %v155, 0.0
      %158 = vst [vmem:[#allocation8] sm:$0xff] %v156
      %159 = vst [vmem:[#allocation8 + $0x8] sm:$0xff] %v157
    $region29: #{tpu_custom_call.1} parent=1 // pred_fallthru
      _
    // Predicated region
    $region30: #{tpu_custom_call.1} parent=1 // pred_check
      _
    $region31: #{tpu_custom_call.1} parent=1 // pred_check_branch
      %161 = sbr.rel (0) target = $region33
    $region32: #{tpu_custom_call.1} parent=1 // pred_region
      %163 = vsyncadd [#allocation5], 0
      %s164 = sshll.u32 [#allocation8], 4
      %s165 = int_to_ptr.vmem [resolvable:$true] %s164
      %s166 = sshll.u32 %s3, 4
      %s167 = int_to_ptr.hbm [resolvable:$true] %s166
      %172 = dma.vmem_to_hbm [thread:$0]  %s165, 256, %s167, [#allocation5], 128, 128, 8
    $region33: #{tpu_custom_call.1} parent=1 // pred_fallthru
      _
    // Predicated region
    $region34: #{tpu_custom_call.1} parent=1 // pred_check
      _
    $region35: #{tpu_custom_call.1} parent=1 // pred_check_branch
      %174 = sbr.rel (0) target = $region37
    $region36: #{tpu_custom_call.1} parent=1 // pred_region
      %176 = dma.done [#allocation5], 256
    $region37: #{tpu_custom_call.1} parent=1 // pred_fallthru
      _
    %177 = vsyncpa [#allocation4], 1
    %178 = vsyncpa [#allocation7], 1
    %179 = vsyncpa [#allocation5], 1

</llo_original>
